<compile_context>
chip_gen: v5e
topology: v5e:2x2
jax: 0.10.0
libtpu: 0.0.40
codegen_flags: <defaults>
</compile_context>

<pallas_src>
import functools

import jax
import jax.numpy as jnp
from jax.experimental import pallas as pl
from jax.experimental.pallas import tpu as pltpu


IN_FEATURES = 512          # 16*16*2
OUT_FEATURES = 32          # 16*2
LAYER_DIMS = [(IN_FEATURES, 128), (128, 256), (256, 256), (256, 128),
              (128, OUT_FEATURES)]
TB_MAX = 2048              # max batch tile (fits v7x's 64 MiB VMEM easily)


def _round_up(x, m):
    return (x + m - 1) // m * m


def _cdiv(a, b):
    return (a + b - 1) // b


def _choose_tile(B, tb_max):
    """Pick (TB, B_pad) minimizing padding; >=2 (even) grid steps when B>=32."""
    n_tiles = max(_cdiv(B, tb_max), 1)
    if B >= 32 and n_tiles < 2:
        n_tiles = 2                      # let v7x use both TensorCores
    if n_tiles > 1 and n_tiles % 2 == 1:
        n_tiles += 1                     # even step count -> balanced cores
    TB = _round_up(_cdiv(B, n_tiles), 16)   # multiple of 16 for bf16 sublanes
    B_pad = _round_up(B, TB)
    return TB, B_pad


# ---------------------------------------------------------------------------
# Kernel: full 5-layer MLP for one (TB, 512) batch tile.
# x arrives as f32 and is cast to bf16 in-kernel; weights are bf16 (in, out),
# biases f32 (1, out).  MXU runs bf16 with f32 accumulation; bias-add + ReLU
# + downcast are fused into a single elementwise pass per hidden layer.
# ---------------------------------------------------------------------------
def mlp_kernel(x_ref,
               w1_ref, b1_ref,
               w2_ref, b2_ref,
               w3_ref, b3_ref,
               w4_ref, b4_ref,
               w5_ref, b5_ref,
               out_ref):
    def hidden(h_bf16, w_ref, b_ref):
        acc = jnp.dot(h_bf16, w_ref[...], preferred_element_type=jnp.float32)
        # fused: bias-add + ReLU + bf16 downcast in one elementwise chain
        return jnp.maximum(acc + b_ref[...], 0.0).astype(jnp.bfloat16)

    h = x_ref[...].astype(jnp.bfloat16)          # in-kernel f32 -> bf16 cast
    h = hidden(h, w1_ref, b1_ref)
    h = hidden(h, w2_ref, b2_ref)
    h = hidden(h, w3_ref, b3_ref)
    h = hidden(h, w4_ref, b4_ref)

    # Final linear layer (no ReLU); real 32-wide output block, f32.
    logits = jnp.dot(h, w5_ref[...], preferred_element_type=jnp.float32) + b5_ref[...]
    out_ref[...] = logits.astype(out_ref.dtype)


# ---------------------------------------------------------------------------
# Wrapper: balanced batch tiling, bf16 weights, 1-D batch grid.
# ---------------------------------------------------------------------------
@functools.partial(jax.jit, static_argnames=("tb_max",))
def ff_neural_network2(x, params, tb_max=TB_MAX):
    """FFNeuralNetwork2 forward.

    x:      (B, 512) float32
    params: list of (W, b), W as (in, out) f32, b as (1, out) f32
    returns (B, 32) float32
    """
    B = x.shape[0]
    TB, B_pad = _choose_tile(B, tb_max)
    grid = (B_pad // TB,)

    # Pad batch only when needed (no cast copy: kernel reads f32 directly).
    x_in = x if B_pad == B else jnp.pad(x, ((0, B_pad - B), (0, 0)))

    # Weights bf16 (MXU inputs), biases f32 (added to f32 accumulators).
    flat_params = []
    for (w, b) in params:
        flat_params.append(w.astype(jnp.bfloat16))
        flat_params.append(b.astype(jnp.float32))

    # --- BlockSpecs ---
    x_spec = pl.BlockSpec((TB, IN_FEATURES), lambda i: (i, 0))
    out_spec = pl.BlockSpec((TB, OUT_FEATURES), lambda i: (i, 0))
    # Weights / biases: full-array blocks, constant index_map -> resident in
    # VMEM across all grid steps (fetched once).
    param_specs = [pl.BlockSpec(p.shape, lambda i: (0, 0)) for p in flat_params]

    # --- cost estimate / compiler params ---
    flops = 2 * sum(fi * fo for fi, fo in LAYER_DIMS) * B_pad
    weight_bytes = sum(int(p.size) * p.dtype.itemsize for p in flat_params)
    bytes_accessed = (B_pad * IN_FEATURES * 4          # x (f32, read once)
                      + B_pad * OUT_FEATURES * 4       # out (f32)
                      + weight_bytes)
    cost = pl.CostEstimate(flops=flops, transcendentals=0,
                           bytes_accessed=bytes_accessed)

    out = pl.pallas_call(
        mlp_kernel,
        out_shape=jax.ShapeDtypeStruct((B_pad, OUT_FEATURES), jnp.float32),
        grid=grid,
        in_specs=[x_spec] + param_specs,
        out_specs=out_spec,
        compiler_params=pltpu.CompilerParams(
            dimension_semantics=("parallel",),          # megacore on v7x
            vmem_limit_bytes=32 * 1024 * 1024,          # safe on v5e/v6e/v7x
        ),
        cost_estimate=cost,
    )(x_in, *flat_params)

    return out if B_pad == B else out[:B]


# ---------------------------------------------------------------------------
# Deterministic parameter init (PyTorch nn.Linear default: U(-1/sqrt(fan_in), +))
# ---------------------------------------------------------------------------
def init_params(key, layer_dims):
    params = []
    for (fan_in, fan_out) in layer_dims:
        key, kw, kb = jax.random.split(key, 3)
        bound = 1.0 / jnp.sqrt(fan_in)
        # stored as (in, out) so the kernel computes x @ W + b directly
        w = jax.random.uniform(kw, (fan_in, fan_out), jnp.float32, -bound, bound)
        b = jax.random.uniform(kb, (1, fan_out), jnp.float32, -bound, bound)
        params.append((w, b))
    return params


def reference_forward_mixed(x, params):
    """Same mixed precision as the kernel: bf16 MXU inputs, f32 accumulation."""
    h = x.astype(jnp.bfloat16)
    n = len(params)
    for i, (w, b) in enumerate(params):
        h = jnp.dot(h, w.astype(jnp.bfloat16),
                    preferred_element_type=jnp.float32) + b
        if i < n - 1:
            h = jnp.maximum(h, 0.0).astype(jnp.bfloat16)
    return h


def reference_forward_f32(x, params):
    h = x
    n = len(params)
    for i, (w, b) in enumerate(params):
        h = h @ w + b
        if i < n - 1:
            h = jnp.maximum(h, 0.0)
    return h


if __name__ == "__main__":
    key = jax.random.PRNGKey(0)
    key, kp = jax.random.split(key)
    params = init_params(kp, LAYER_DIMS)

    # --- Test 1: small batch (single grid step, padded rows dropped) ---
    key, kx = jax.random.split(key)
    x_small = jax.random.normal(kx, (2, IN_FEATURES), dtype=jnp.float32)
    out_small = jax.block_until_ready(ff_neural_network2(x_small, params))
    assert out_small.shape == (2, OUT_FEATURES)
    ref_mixed = reference_forward_mixed(x_small, params)
    assert jnp.allclose(out_small, ref_mixed, atol=2e-2, rtol=2e-2), \
        "small-batch mismatch vs mixed-precision reference"
    ref_f32 = reference_forward_f32(x_small, params)
    assert jnp.allclose(out_small, ref_f32, atol=1e-1, rtol=1e-1), \
        "small-batch mismatch vs f32 reference"

    # --- Test 2: multi-tile grid with batch padding (B % TB != 0) ---
    key, kx2 = jax.random.split(key)
    x_big = jax.random.normal(kx2, (100, IN_FEATURES), dtype=jnp.float32)
    out_big = jax.block_until_ready(ff_neural_network2(x_big, params, tb_max=32))
    assert out_big.shape == (100, OUT_FEATURES)
    ref_big = reference_forward_mixed(x_big, params)
    assert jnp.allclose(out_big, ref_big, atol=2e-2, rtol=2e-2), \
        "multi-tile mismatch vs mixed-precision reference"

    print("KERNEL_OK")
</pallas_src>

<mosaic_0001>
module attributes {stable_mosaic.version = 11 : i64} {
  func.func @mlp_kernel(%arg0: i32, %arg1: memref<16x512xf32, #tpu.memory_space<vmem>>, %arg2: memref<512x128xbf16, #tpu.memory_space<vmem>>, %arg3: memref<1x128xf32, #tpu.memory_space<vmem>>, %arg4: memref<128x256xbf16, #tpu.memory_space<vmem>>, %arg5: memref<1x256xf32, #tpu.memory_space<vmem>>, %arg6: memref<256x256xbf16, #tpu.memory_space<vmem>>, %arg7: memref<1x256xf32, #tpu.memory_space<vmem>>, %arg8: memref<256x128xbf16, #tpu.memory_space<vmem>>, %arg9: memref<1x128xf32, #tpu.memory_space<vmem>>, %arg10: memref<128x32xbf16, #tpu.memory_space<vmem>>, %arg11: memref<1x32xf32, #tpu.memory_space<vmem>>, %arg12: memref<16x32xf32, #tpu.memory_space<vmem>>) attributes {dimension_semantics = [#tpu.dimension_semantics<parallel>], iteration_bounds = array<i64: 1>, scalar_prefetch = 0 : i64, scratch_operands = 0 : i64, tpu.core_type = #tpu.core_type<tc>, window_params = [{transform_indices = @transform_0, window_bounds = array<i64: 16, 512>}, {pipeline_mode = #tpu.pipeline_mode<synchronous>, transform_indices = @transform_1, window_bounds = array<i64: 512, 128>}, {pipeline_mode = #tpu.pipeline_mode<synchronous>, transform_indices = @transform_2, window_bounds = array<i64: 1, 128>}, {pipeline_mode = #tpu.pipeline_mode<synchronous>, transform_indices = @transform_3, window_bounds = array<i64: 128, 256>}, {pipeline_mode = #tpu.pipeline_mode<synchronous>, transform_indices = @transform_4, window_bounds = array<i64: 1, 256>}, {pipeline_mode = #tpu.pipeline_mode<synchronous>, transform_indices = @transform_5, window_bounds = array<i64: 256, 256>}, {pipeline_mode = #tpu.pipeline_mode<synchronous>, transform_indices = @transform_6, window_bounds = array<i64: 1, 256>}, {pipeline_mode = #tpu.pipeline_mode<synchronous>, transform_indices = @transform_7, window_bounds = array<i64: 256, 128>}, {pipeline_mode = #tpu.pipeline_mode<synchronous>, transform_indices = @transform_8, window_bounds = array<i64: 1, 128>}, {pipeline_mode = #tpu.pipeline_mode<synchronous>, transform_indices = @transform_9, window_bounds = array<i64: 128, 32>}, {pipeline_mode = #tpu.pipeline_mode<synchronous>, transform_indices = @transform_10, window_bounds = array<i64: 1, 32>}, {transform_indices = @transform_11, window_bounds = array<i64: 16, 32>}]} {
    %c0 = arith.constant 0 : index
    %c0_0 = arith.constant 0 : index
    %0 = vector.load %arg1[%c0, %c0_0] : memref<16x512xf32, #tpu.memory_space<vmem>>, vector<16x512xf32>
    %1 = arith.truncf %0 : vector<16x512xf32> to vector<16x512xbf16>
    %c0_1 = arith.constant 0 : index
    %c0_2 = arith.constant 0 : index
    %2 = vector.load %arg2[%c0_1, %c0_2] : memref<512x128xbf16, #tpu.memory_space<vmem>>, vector<512x128xbf16>
    %cst = arith.constant dense<0.000000e+00> : vector<16x128xf32>
    %3 = tpu.matmul %1, %2, %cst {dimension_numbers = #tpu.dot_dimension_numbers<[1], [0], [0], [1], [0, 0, 1, 1], [], []>} : vector<16x512xbf16>, vector<512x128xbf16>, vector<16x128xf32> -> vector<16x128xf32>
    %c0_3 = arith.constant 0 : index
    %c0_4 = arith.constant 0 : index
    %4 = vector.load %arg3[%c0_3, %c0_4] : memref<1x128xf32, #tpu.memory_space<vmem>>, vector<1x128xf32>
    %5 = vector.broadcast %4 : vector<1x128xf32> to vector<16x128xf32>
    %6 = arith.addf %3, %5 : vector<16x128xf32>
    %cst_5 = arith.constant 0.000000e+00 : f32
    %7 = vector.broadcast %cst_5 : f32 to vector<16x128xf32>
    %8 = arith.maximumf %6, %7 : vector<16x128xf32>
    %9 = arith.truncf %8 : vector<16x128xf32> to vector<16x128xbf16>
    %c0_6 = arith.constant 0 : index
    %c0_7 = arith.constant 0 : index
    %10 = vector.load %arg4[%c0_6, %c0_7] : memref<128x256xbf16, #tpu.memory_space<vmem>>, vector<128x256xbf16>
    %cst_8 = arith.constant dense<0.000000e+00> : vector<16x256xf32>
    %11 = tpu.matmul %9, %10, %cst_8 {dimension_numbers = #tpu.dot_dimension_numbers<[1], [0], [0], [1], [0, 0, 1, 1], [], []>} : vector<16x128xbf16>, vector<128x256xbf16>, vector<16x256xf32> -> vector<16x256xf32>
    %c0_9 = arith.constant 0 : index
    %c0_10 = arith.constant 0 : index
    %12 = vector.load %arg5[%c0_9, %c0_10] : memref<1x256xf32, #tpu.memory_space<vmem>>, vector<1x256xf32>
    %13 = vector.broadcast %12 : vector<1x256xf32> to vector<16x256xf32>
    %14 = arith.addf %11, %13 : vector<16x256xf32>
    %cst_11 = arith.constant 0.000000e+00 : f32
    %15 = vector.broadcast %cst_11 : f32 to vector<16x256xf32>
    %16 = arith.maximumf %14, %15 : vector<16x256xf32>
    %17 = arith.truncf %16 : vector<16x256xf32> to vector<16x256xbf16>
    %c0_12 = arith.constant 0 : index
    %c0_13 = arith.constant 0 : index
    %18 = vector.load %arg6[%c0_12, %c0_13] : memref<256x256xbf16, #tpu.memory_space<vmem>>, vector<256x256xbf16>
    %cst_14 = arith.constant dense<0.000000e+00> : vector<16x256xf32>
    %19 = tpu.matmul %17, %18, %cst_14 {dimension_numbers = #tpu.dot_dimension_numbers<[1], [0], [0], [1], [0, 0, 1, 1], [], []>} : vector<16x256xbf16>, vector<256x256xbf16>, vector<16x256xf32> -> vector<16x256xf32>
    %c0_15 = arith.constant 0 : index
    %c0_16 = arith.constant 0 : index
    %20 = vector.load %arg7[%c0_15, %c0_16] : memref<1x256xf32, #tpu.memory_space<vmem>>, vector<1x256xf32>
    %21 = vector.broadcast %20 : vector<1x256xf32> to vector<16x256xf32>
    %22 = arith.addf %19, %21 : vector<16x256xf32>
    %cst_17 = arith.constant 0.000000e+00 : f32
    %23 = vector.broadcast %cst_17 : f32 to vector<16x256xf32>
    %24 = arith.maximumf %22, %23 : vector<16x256xf32>
    %25 = arith.truncf %24 : vector<16x256xf32> to vector<16x256xbf16>
    %c0_18 = arith.constant 0 : index
    %c0_19 = arith.constant 0 : index
    %26 = vector.load %arg8[%c0_18, %c0_19] : memref<256x128xbf16, #tpu.memory_space<vmem>>, vector<256x128xbf16>
    %cst_20 = arith.constant dense<0.000000e+00> : vector<16x128xf32>
    %27 = tpu.matmul %25, %26, %cst_20 {dimension_numbers = #tpu.dot_dimension_numbers<[1], [0], [0], [1], [0, 0, 1, 1], [], []>} : vector<16x256xbf16>, vector<256x128xbf16>, vector<16x128xf32> -> vector<16x128xf32>
    %c0_21 = arith.constant 0 : index
    %c0_22 = arith.constant 0 : index
    %28 = vector.load %arg9[%c0_21, %c0_22] : memref<1x128xf32, #tpu.memory_space<vmem>>, vector<1x128xf32>
    %29 = vector.broadcast %28 : vector<1x128xf32> to vector<16x128xf32>
    %30 = arith.addf %27, %29 : vector<16x128xf32>
    %cst_23 = arith.constant 0.000000e+00 : f32
    %31 = vector.broadcast %cst_23 : f32 to vector<16x128xf32>
    %32 = arith.maximumf %30, %31 : vector<16x128xf32>
    %33 = arith.truncf %32 : vector<16x128xf32> to vector<16x128xbf16>
    %c0_24 = arith.constant 0 : index
    %c0_25 = arith.constant 0 : index
    %34 = vector.load %arg10[%c0_24, %c0_25] : memref<128x32xbf16, #tpu.memory_space<vmem>>, vector<128x32xbf16>
    %cst_26 = arith.constant dense<0.000000e+00> : vector<16x32xf32>
    %35 = tpu.matmul %33, %34, %cst_26 {dimension_numbers = #tpu.dot_dimension_numbers<[1], [0], [0], [1], [0, 0, 1, 1], [], []>} : vector<16x128xbf16>, vector<128x32xbf16>, vector<16x32xf32> -> vector<16x32xf32>
    %c0_27 = arith.constant 0 : index
    %c0_28 = arith.constant 0 : index
    %36 = vector.load %arg11[%c0_27, %c0_28] : memref<1x32xf32, #tpu.memory_space<vmem>>, vector<1x32xf32>
    %37 = vector.broadcast %36 : vector<1x32xf32> to vector<16x32xf32>
    %38 = arith.addf %35, %37 : vector<16x32xf32>
    %c0_29 = arith.constant 0 : index
    %c0_30 = arith.constant 0 : index
    %39 = vector.load %arg12[%c0_29, %c0_30] : memref<16x32xf32, #tpu.memory_space<vmem>>, vector<16x32xf32>
    tpu.vector_store %arg12[%c0_29, %c0_30], %38 {strides = array<i32>} : memref<16x32xf32, #tpu.memory_space<vmem>>, vector<16x32xf32>,
    return
  }
  func.func @transform_0(%arg0: i32) -> (i32, i32) {
    %c0_i32 = arith.constant 0 : i32
    %c0_i32_0 = arith.constant 0 : i32
    return %arg0, %c0_i32 : i32, i32
  }
  func.func @transform_1(%arg0: i32) -> (i32, i32) {
    %c0_i32 = arith.constant 0 : i32
    %c0_i32_0 = arith.constant 0 : i32
    %c0_i32_1 = arith.constant 0 : i32
    return %c0_i32, %c0_i32_0 : i32, i32
  }
  func.func @transform_2(%arg0: i32) -> (i32, i32) {
    %c0_i32 = arith.constant 0 : i32
    %c0_i32_0 = arith.constant 0 : i32
    %c0_i32_1 = arith.constant 0 : i32
    return %c0_i32, %c0_i32_0 : i32, i32
  }
  func.func @transform_3(%arg0: i32) -> (i32, i32) {
    %c0_i32 = arith.constant 0 : i32
    %c0_i32_0 = arith.constant 0 : i32
    %c0_i32_1 = arith.constant 0 : i32
    return %c0_i32, %c0_i32_0 : i32, i32
  }
  func.func @transform_4(%arg0: i32) -> (i32, i32) {
    %c0_i32 = arith.constant 0 : i32
    %c0_i32_0 = arith.constant 0 : i32
    %c0_i32_1 = arith.constant 0 : i32
    return %c0_i32, %c0_i32_0 : i32, i32
  }
  func.func @transform_5(%arg0: i32) -> (i32, i32) {
    %c0_i32 = arith.constant 0 : i32
    %c0_i32_0 = arith.constant 0 : i32
    %c0_i32_1 = arith.constant 0 : i32
    return %c0_i32, %c0_i32_0 : i32, i32
  }
  func.func @transform_6(%arg0: i32) -> (i32, i32) {
    %c0_i32 = arith.constant 0 : i32
    %c0_i32_0 = arith.constant 0 : i32
    %c0_i32_1 = arith.constant 0 : i32
    return %c0_i32, %c0_i32_0 : i32, i32
  }
  func.func @transform_7(%arg0: i32) -> (i32, i32) {
    %c0_i32 = arith.constant 0 : i32
    %c0_i32_0 = arith.constant 0 : i32
    %c0_i32_1 = arith.constant 0 : i32
    return %c0_i32, %c0_i32_0 : i32, i32
  }
  func.func @transform_8(%arg0: i32) -> (i32, i32) {
    %c0_i32 = arith.constant 0 : i32
    %c0_i32_0 = arith.constant 0 : i32
    %c0_i32_1 = arith.constant 0 : i32
    return %c0_i32, %c0_i32_0 : i32, i32
  }
  func.func @transform_9(%arg0: i32) -> (i32, i32) {
    %c0_i32 = arith.constant 0 : i32
    %c0_i32_0 = arith.constant 0 : i32
    %c0_i32_1 = arith.constant 0 : i32
    return %c0_i32, %c0_i32_0 : i32, i32
  }
  func.func @transform_10(%arg0: i32) -> (i32, i32) {
    %c0_i32 = arith.constant 0 : i32
    %c0_i32_0 = arith.constant 0 : i32
    %c0_i32_1 = arith.constant 0 : i32
    return %c0_i32, %c0_i32_0 : i32, i32
  }
  func.func @transform_11(%arg0: i32) -> (i32, i32) {
    %c0_i32 = arith.constant 0 : i32
    %c0_i32_0 = arith.constant 0 : i32
    return %arg0, %c0_i32 : i32, i32
  }
}

</mosaic_0001>

<llo_original>
// kernel: ff_neural_network2.1
$region0: #{ff_neural_network2.1}
  #allocation0 [shape = 'u32[]', space=smem, size = 0x4, offset = 0x4, fixed_abs, tag = 'smem constant byte address 0x4 - core index']
  #allocation1 [shape = 'u32[72,128]{1,0:T(1,128)}', space=vmem, size = 0x9000, scoped, tag = 'internal scratch']
  %s0 = inlined_call_operand.vmem [shape: f32[16,512], index: 0, kind: input, shape index: {}]
  %s1 = inlined_call_operand.vmem [shape: bf16[512,128], index: 1, kind: input, shape index: {}]
  %s2 = inlined_call_operand.vmem [shape: f32[1,128], index: 2, kind: input, shape index: {}]
  %s3 = inlined_call_operand.vmem [shape: bf16[128,256], index: 3, kind: input, shape index: {}]
  %s4 = inlined_call_operand.vmem [shape: f32[1,256], index: 4, kind: input, shape index: {}]
  %s5 = inlined_call_operand.vmem [shape: bf16[256,256], index: 5, kind: input, shape index: {}]
  %s6 = inlined_call_operand.vmem [shape: f32[1,256], index: 6, kind: input, shape index: {}]
  %s7 = inlined_call_operand.vmem [shape: bf16[256,128], index: 7, kind: input, shape index: {}]
  %s8 = inlined_call_operand.vmem [shape: f32[1,128], index: 8, kind: input, shape index: {}]
  %s9 = inlined_call_operand.vmem [shape: bf16[128,32], index: 9, kind: input, shape index: {}]
  %s10 = inlined_call_operand.vmem [shape: f32[1,32], index: 10, kind: input, shape index: {}]
  %s11 = inlined_call_operand.vmem [shape: f32[16,32], index: 11, kind: output, shape index: {}]
  %s12 = sld [smem:[#allocation0]]
  $region54: #{ff_neural_network2.1} parent=0
    _
  %s14 = ssub.s32 1, %s12
  %s15 = scalar_select 0, %s14, %s12
  // Predicated region
  $region2: #{ff_neural_network2.1} parent=0 // pred_check
    _
  $region3: #{ff_neural_network2.1} parent=0 // pred_check_branch
    %17 = sbr.rel (0) target = $region5
  $region4: #{ff_neural_network2.1} parent=0 // pred_region
    _
  $region5: #{ff_neural_network2.1} parent=0 // pred_fallthru
    _
  // Predicated region
  $region6: #{ff_neural_network2.1} parent=0 // pred_check
    _
  $region7: #{ff_neural_network2.1} parent=0 // pred_check_branch
    %19 = sbr.rel (0) target = $region9
  $region8: #{ff_neural_network2.1} parent=0 // pred_region
    _
  $region9: #{ff_neural_network2.1} parent=0 // pred_fallthru
    _
  // Predicated region
  $region10: #{ff_neural_network2.1} parent=0 // pred_check
    _
  $region11: #{ff_neural_network2.1} parent=0 // pred_check_branch
    %21 = sbr.rel (0) target = $region13
  $region12: #{ff_neural_network2.1} parent=0 // pred_region
    _
  $region13: #{ff_neural_network2.1} parent=0 // pred_fallthru
    _
  // Predicated region
  $region14: #{ff_neural_network2.1} parent=0 // pred_check
    _
  $region15: #{ff_neural_network2.1} parent=0 // pred_check_branch
    %23 = sbr.rel (0) target = $region17
  $region16: #{ff_neural_network2.1} parent=0 // pred_region
    _
  $region17: #{ff_neural_network2.1} parent=0 // pred_fallthru
    _
  // Predicated region
  $region18: #{ff_neural_network2.1} parent=0 // pred_check
    _
  $region19: #{ff_neural_network2.1} parent=0 // pred_check_branch
    %25 = sbr.rel (0) target = $region21
  $region20: #{ff_neural_network2.1} parent=0 // pred_region
    _
  $region21: #{ff_neural_network2.1} parent=0 // pred_fallthru
    _
  // Predicated region
  $region22: #{ff_neural_network2.1} parent=0 // pred_check
    _
  $region23: #{ff_neural_network2.1} parent=0 // pred_check_branch
    %27 = sbr.rel (0) target = $region25
  $region24: #{ff_neural_network2.1} parent=0 // pred_region
    _
  $region25: #{ff_neural_network2.1} parent=0 // pred_fallthru
    _
  // Predicated region
  $region26: #{ff_neural_network2.1} parent=0 // pred_check
    _
  $region27: #{ff_neural_network2.1} parent=0 // pred_check_branch
    %29 = sbr.rel (0) target = $region29
  $region28: #{ff_neural_network2.1} parent=0 // pred_region
    _
  $region29: #{ff_neural_network2.1} parent=0 // pred_fallthru
    _
  // Predicated region
  $region30: #{ff_neural_network2.1} parent=0 // pred_check
    _
  $region31: #{ff_neural_network2.1} parent=0 // pred_check_branch
    %31 = sbr.rel (0) target = $region33
  $region32: #{ff_neural_network2.1} parent=0 // pred_region
    _
  $region33: #{ff_neural_network2.1} parent=0 // pred_fallthru
    _
  // Predicated region
  $region34: #{ff_neural_network2.1} parent=0 // pred_check
    _
  $region35: #{ff_neural_network2.1} parent=0 // pred_check_branch
    %33 = sbr.rel (0) target = $region37
  $region36: #{ff_neural_network2.1} parent=0 // pred_region
    _
  $region37: #{ff_neural_network2.1} parent=0 // pred_fallthru
    _
  // Predicated region
  $region38: #{ff_neural_network2.1} parent=0 // pred_check
    _
  $region39: #{ff_neural_network2.1} parent=0 // pred_check_branch
    %35 = sbr.rel (0) target = $region41
  $region40: #{ff_neural_network2.1} parent=0 // pred_region
    _
  $region41: #{ff_neural_network2.1} parent=0 // pred_fallthru
    _
  // Predicated region
  $region42: #{ff_neural_network2.1} parent=0 // pred_check
    _
  $region43: #{ff_neural_network2.1} parent=0 // pred_check_branch
    %37 = sbr.rel (0) target = $region45
  $region44: #{ff_neural_network2.1} parent=0 // pred_region
    _
  $region45: #{ff_neural_network2.1} parent=0 // pred_fallthru
    _
  %v38 = vld [vmem:[%s0] sm:$0xff]
  %v39 = vld [vmem:[%s0 + $0x8] sm:$0xff]
  %v40 = vld [vmem:[%s0 + $0x10] sm:$0xff]
  %v41 = vld [vmem:[%s0 + $0x18] sm:$0xff]
  %v42 = vld [vmem:[%s0 + $0x20] sm:$0xff]
  %v43 = vld [vmem:[%s0 + $0x28] sm:$0xff]
  %v44 = vld [vmem:[%s0 + $0x30] sm:$0xff]
  %v45 = vld [vmem:[%s0 + $0x38] sm:$0xff]
  %v46 = vpack.c.bf16 %v42, %v38
  %v47 = vpack.c.bf16 %v43, %v39
  %v48 = vpack.c.bf16 %v44, %v40
  %v49 = vpack.c.bf16 %v45, %v41
  %v50 = vld [vmem:[%s1] sm:$0xf]
  %v51 = vld [vmem:[%s1 + $0x4] sm:$0xf]
  %v52 = vld [vmem:[%s1 + $0x8] sm:$0xf]
  %v53 = vld [vmem:[%s1 + $0xc] sm:$0xf]
  %v54 = vld [vmem:[%s1 + $0x10] sm:$0xf]
  %v55 = vld [vmem:[%s1 + $0x14] sm:$0xf]
  %v56 = vld [vmem:[%s1 + $0x18] sm:$0xf]
  %v57 = vld [vmem:[%s1 + $0x1c] sm:$0xf]
  %v58 = vld [vmem:[%s1 + $0x20] sm:$0xf]
  %v59 = vld [vmem:[%s1 + $0x24] sm:$0xf]
  %v60 = vld [vmem:[%s1 + $0x28] sm:$0xf]
  %v61 = vld [vmem:[%s1 + $0x2c] sm:$0xf]
  %v62 = vld [vmem:[%s1 + $0x30] sm:$0xf]
  %v63 = vld [vmem:[%s1 + $0x34] sm:$0xf]
  %v64 = vld [vmem:[%s1 + $0x38] sm:$0xf]
  %v65 = vld [vmem:[%s1 + $0x3c] sm:$0xf]
  %v66 = vld [vmem:[%s1 + $0x40] sm:$0xf]
  %v67 = vld [vmem:[%s1 + $0x44] sm:$0xf]
  %v68 = vld [vmem:[%s1 + $0x48] sm:$0xf]
  %v69 = vld [vmem:[%s1 + $0x4c] sm:$0xf]
  %v70 = vld [vmem:[%s1 + $0x50] sm:$0xf]
  %v71 = vld [vmem:[%s1 + $0x54] sm:$0xf]
  %v72 = vld [vmem:[%s1 + $0x58] sm:$0xf]
  %v73 = vld [vmem:[%s1 + $0x5c] sm:$0xf]
  %v74 = vld [vmem:[%s1 + $0x60] sm:$0xf]
  %v75 = vld [vmem:[%s1 + $0x64] sm:$0xf]
  %v76 = vld [vmem:[%s1 + $0x68] sm:$0xf]
  %v77 = vld [vmem:[%s1 + $0x6c] sm:$0xf]
  %v78 = vld [vmem:[%s1 + $0x70] sm:$0xf]
  %v79 = vld [vmem:[%s1 + $0x74] sm:$0xf]
  %v80 = vld [vmem:[%s1 + $0x78] sm:$0xf]
  %v81 = vld [vmem:[%s1 + $0x7c] sm:$0xf]
  %v82 = vld [vmem:[%s1 + $0x80] sm:$0xf]
  %v83 = vld [vmem:[%s1 + $0x84] sm:$0xf]
  %v84 = vld [vmem:[%s1 + $0x88] sm:$0xf]
  %v85 = vld [vmem:[%s1 + $0x8c] sm:$0xf]
  %v86 = vld [vmem:[%s1 + $0x90] sm:$0xf]
  %v87 = vld [vmem:[%s1 + $0x94] sm:$0xf]
  %v88 = vld [vmem:[%s1 + $0x98] sm:$0xf]
  %v89 = vld [vmem:[%s1 + $0x9c] sm:$0xf]
  %v90 = vld [vmem:[%s1 + $0xa0] sm:$0xf]
  %v91 = vld [vmem:[%s1 + $0xa4] sm:$0xf]
  %v92 = vld [vmem:[%s1 + $0xa8] sm:$0xf]
  %v93 = vld [vmem:[%s1 + $0xac] sm:$0xf]
  %v94 = vld [vmem:[%s1 + $0xb0] sm:$0xf]
  %v95 = vld [vmem:[%s1 + $0xb4] sm:$0xf]
  %v96 = vld [vmem:[%s1 + $0xb8] sm:$0xf]
  %v97 = vld [vmem:[%s1 + $0xbc] sm:$0xf]
  %v98 = vld [vmem:[%s1 + $0xc0] sm:$0xf]
  %v99 = vld [vmem:[%s1 + $0xc4] sm:$0xf]
  %v100 = vld [vmem:[%s1 + $0xc8] sm:$0xf]
  %v101 = vld [vmem:[%s1 + $0xcc] sm:$0xf]
  %v102 = vld [vmem:[%s1 + $0xd0] sm:$0xf]
  %v103 = vld [vmem:[%s1 + $0xd4] sm:$0xf]
  %v104 = vld [vmem:[%s1 + $0xd8] sm:$0xf]
  %v105 = vld [vmem:[%s1 + $0xdc] sm:$0xf]
  %v106 = vld [vmem:[%s1 + $0xe0] sm:$0xf]
  %v107 = vld [vmem:[%s1 + $0xe4] sm:$0xf]
  %v108 = vld [vmem:[%s1 + $0xe8] sm:$0xf]
  %v109 = vld [vmem:[%s1 + $0xec] sm:$0xf]
  %v110 = vld [vmem:[%s1 + $0xf0] sm:$0xf]
  %v111 = vld [vmem:[%s1 + $0xf4] sm:$0xf]
  %v112 = vld [vmem:[%s1 + $0xf8] sm:$0xf]
  %v113 = vld [vmem:[%s1 + $0xfc] sm:$0xf]
  %v114 = vld [vmem:[%s2] sm:$0x1]
  %v116 = vperm.slane %v114, 0
  %v182 = vunpack.c.l.b16 %v50
  %v183 = vunpack.c.l.b16 %v51
  %v184 = vunpack.c.l.b16 %v52
  %v185 = vunpack.c.l.b16 %v53
  %v186 = vunpack.c.l.b16 %v54
  %v187 = vunpack.c.l.b16 %v55
  %v188 = vunpack.c.l.b16 %v56
  %v189 = vunpack.c.l.b16 %v57
  %v190 = vunpack.c.l.b16 %v58
  %v191 = vunpack.c.l.b16 %v59
  %v192 = vunpack.c.l.b16 %v60
  %v193 = vunpack.c.l.b16 %v61
  %v194 = vunpack.c.l.b16 %v62
  %v195 = vunpack.c.l.b16 %v63
  %v196 = vunpack.c.l.b16 %v64
  %v197 = vunpack.c.l.b16 %v65
  %v198 = vunpack.c.l.b16 %v66
  %v199 = vunpack.c.l.b16 %v67
  %v200 = vunpack.c.l.b16 %v68
  %v201 = vunpack.c.l.b16 %v69
  %v202 = vunpack.c.l.b16 %v70
  %v203 = vunpack.c.l.b16 %v71
  %v204 = vunpack.c.l.b16 %v72
  %v205 = vunpack.c.l.b16 %v73
  %v206 = vunpack.c.l.b16 %v74
  %v207 = vunpack.c.l.b16 %v75
  %v208 = vunpack.c.l.b16 %v76
  %v209 = vunpack.c.l.b16 %v77
  %v210 = vunpack.c.l.b16 %v78
  %v211 = vunpack.c.l.b16 %v79
  %v212 = vunpack.c.l.b16 %v80
  %v213 = vunpack.c.l.b16 %v81
  %v214 = vunpack.c.l.b16 %v82
  %v215 = vunpack.c.l.b16 %v83
  %v216 = vunpack.c.l.b16 %v84
  %v217 = vunpack.c.l.b16 %v85
  %v218 = vunpack.c.l.b16 %v86
  %v219 = vunpack.c.l.b16 %v87
  %v220 = vunpack.c.l.b16 %v88
  %v221 = vunpack.c.l.b16 %v89
  %v222 = vunpack.c.l.b16 %v90
  %v223 = vunpack.c.l.b16 %v91
  %v224 = vunpack.c.l.b16 %v92
  %v225 = vunpack.c.l.b16 %v93
  %v226 = vunpack.c.l.b16 %v94
  %v227 = vunpack.c.l.b16 %v95
  %v228 = vunpack.c.l.b16 %v96
  %v229 = vunpack.c.l.b16 %v97
  %v230 = vunpack.c.l.b16 %v98
  %v231 = vunpack.c.l.b16 %v99
  %v232 = vunpack.c.l.b16 %v100
  %v233 = vunpack.c.l.b16 %v101
  %v234 = vunpack.c.l.b16 %v102
  %v235 = vunpack.c.l.b16 %v103
  %v236 = vunpack.c.l.b16 %v104
  %v237 = vunpack.c.l.b16 %v105
  %v238 = vunpack.c.l.b16 %v106
  %v239 = vunpack.c.l.b16 %v107
  %v240 = vunpack.c.l.b16 %v108
  %v241 = vunpack.c.l.b16 %v109
  %v242 = vunpack.c.l.b16 %v110
  %v243 = vunpack.c.l.b16 %v111
  %v244 = vunpack.c.l.b16 %v112
  %v245 = vunpack.c.l.b16 %v113
  %v246 = vpack.c.b16 %v183, %v182
  %v247 = vpack.c.b16 %v185, %v184
  %v248 = vpack.c.b16 %v187, %v186
  %v249 = vpack.c.b16 %v189, %v188
  %v250 = vpack.c.b16 %v191, %v190
  %v251 = vpack.c.b16 %v193, %v192
  %v252 = vpack.c.b16 %v195, %v194
  %v253 = vpack.c.b16 %v197, %v196
  %v254 = vpack.c.b16 %v199, %v198
  %v255 = vpack.c.b16 %v201, %v200
  %v256 = vpack.c.b16 %v203, %v202
  %v257 = vpack.c.b16 %v205, %v204
  %v258 = vpack.c.b16 %v207, %v206
  %v259 = vpack.c.b16 %v209, %v208
  %v260 = vpack.c.b16 %v211, %v210
  %v261 = vpack.c.b16 %v213, %v212
  %v262 = vpack.c.b16 %v215, %v214
  %v263 = vpack.c.b16 %v217, %v216
  %v264 = vpack.c.b16 %v219, %v218
  %v265 = vpack.c.b16 %v221, %v220
  %v266 = vpack.c.b16 %v223, %v222
  %v267 = vpack.c.b16 %v225, %v224
  %v268 = vpack.c.b16 %v227, %v226
  %v269 = vpack.c.b16 %v229, %v228
  %v270 = vpack.c.b16 %v231, %v230
  %v271 = vpack.c.b16 %v233, %v232
  %v272 = vpack.c.b16 %v235, %v234
  %v273 = vpack.c.b16 %v237, %v236
  %v274 = vpack.c.b16 %v239, %v238
  %v275 = vpack.c.b16 %v241, %v240
  %v276 = vpack.c.b16 %v243, %v242
  %v277 = vpack.c.b16 %v245, %v244
  %310 = vmatpush.bf16.msra.mxu0 %v253
  %311 = vmatpush.bf16.msra.mxu0 %v252
  %312 = vmatpush.bf16.msra.mxu0 %v251
  %313 = vmatpush.bf16.msra.mxu0 %v250
  %314 = vmatpush.bf16.msra.mxu0 %v249
  %315 = vmatpush.bf16.msra.mxu0 %v248
  %316 = vmatpush.bf16.msra.mxu0 %v247
  %317 = vmatpush.bf16.msra.mxu0 %v246
  %318 = vmatmul.bf16.gmra.mxu0 %v46
  %v319 = vpop.f32.mrf.mxu0
  %v320 = vadd.f32 %v116, %v319
  %v321 = vpop.f32.mrf.mxu0
  %v322 = vadd.f32 %v116, %v321
  %323 = vdwg.mxu0
  %324 = vmatpush.bf16.msra.mxu0 %v261
  %325 = vmatpush.bf16.msra.mxu0 %v260
  %326 = vmatpush.bf16.msra.mxu0 %v259
  %327 = vmatpush.bf16.msra.mxu0 %v258
  %328 = vmatpush.bf16.msra.mxu0 %v257
  %329 = vmatpush.bf16.msra.mxu0 %v256
  %330 = vmatpush.bf16.msra.mxu0 %v255
  %331 = vmatpush.bf16.msra.mxu0 %v254
  %332 = vmatmul.bf16.gmra.mxu0 %v47
  %v333 = vpop.f32.mrf.mxu0
  %v334 = vadd.f32 %v320, %v333
  %v335 = vpop.f32.mrf.mxu0
  %v336 = vadd.f32 %v322, %v335
  %337 = vdwg.mxu0
  %338 = vmatpush.bf16.msra.mxu0 %v269
  %339 = vmatpush.bf16.msra.mxu0 %v268
  %340 = vmatpush.bf16.msra.mxu0 %v267
  %341 = vmatpush.bf16.msra.mxu0 %v266
  %342 = vmatpush.bf16.msra.mxu0 %v265
  %343 = vmatpush.bf16.msra.mxu0 %v264
  %344 = vmatpush.bf16.msra.mxu0 %v263
  %345 = vmatpush.bf16.msra.mxu0 %v262
  %346 = vmatmul.bf16.gmra.mxu0 %v48
  %v347 = vpop.f32.mrf.mxu0
  %v348 = vadd.f32 %v334, %v347
  %v349 = vpop.f32.mrf.mxu0
  %v350 = vadd.f32 %v336, %v349
  %351 = vdwg.mxu0
  %352 = vmatpush.bf16.msra.mxu0 %v277
  %353 = vmatpush.bf16.msra.mxu0 %v276
  %354 = vmatpush.bf16.msra.mxu0 %v275
  %355 = vmatpush.bf16.msra.mxu0 %v274
  %356 = vmatpush.bf16.msra.mxu0 %v273
  %357 = vmatpush.bf16.msra.mxu0 %v272
  %358 = vmatpush.bf16.msra.mxu0 %v271
  %359 = vmatpush.bf16.msra.mxu0 %v270
  %360 = vmatmul.bf16.gmra.mxu0 %v49
  %v361 = vpop.f32.mrf.mxu0
  %v362 = vadd.f32 %v348, %v361
  %v363 = vpop.f32.mrf.mxu0
  %v364 = vadd.f32 %v350, %v363
  %365 = vdwg.mxu0
  %v366 = vmax.f32 %v362, 0.0
  %v367 = vmax.f32 %v364, 0.0
  %v368 = vpack.c.bf16 %v367, %v366
  %v369 = vld [vmem:[%s3] sm:$0xff]
  %v370 = vld [vmem:[%s3 + $0x8] sm:$0xff]
  %v371 = vld [vmem:[%s3 + $0x10] sm:$0xff]
  %v372 = vld [vmem:[%s3 + $0x18] sm:$0xff]
  %v373 = vld [vmem:[%s3 + $0x20] sm:$0xff]
  %v374 = vld [vmem:[%s3 + $0x28] sm:$0xff]
  %v375 = vld [vmem:[%s3 + $0x30] sm:$0xff]
  %v376 = vld [vmem:[%s3 + $0x38] sm:$0xff]
  %v377 = vld [vmem:[%s3 + $0x40] sm:$0xff]
  %v378 = vld [vmem:[%s3 + $0x48] sm:$0xff]
  %v379 = vld [vmem:[%s3 + $0x50] sm:$0xff]
  %v380 = vld [vmem:[%s3 + $0x58] sm:$0xff]
  %v381 = vld [vmem:[%s3 + $0x60] sm:$0xff]
  %v382 = vld [vmem:[%s3 + $0x68] sm:$0xff]
  %v383 = vld [vmem:[%s3 + $0x70] sm:$0xff]
  %v384 = vld [vmem:[%s3 + $0x78] sm:$0xff]
  %v385 = vld [vmem:[%s4] sm:$0x3]
  %v387 = vperm.slane %v385, 0
  %v388 = vperm.slane %v385, 1
  %v407 = vunpack.c.l.b16 %v369
  %v408 = vunpack.c.h.b16 %v369
  %v409 = vunpack.c.l.b16 %v370
  %v410 = vunpack.c.h.b16 %v370
  %v411 = vunpack.c.l.b16 %v371
  %v412 = vunpack.c.h.b16 %v371
  %v413 = vunpack.c.l.b16 %v372
  %v414 = vunpack.c.h.b16 %v372
  %v415 = vunpack.c.l.b16 %v373
  %v416 = vunpack.c.h.b16 %v373
  %v417 = vunpack.c.l.b16 %v374
  %v418 = vunpack.c.h.b16 %v374
  %v419 = vunpack.c.l.b16 %v375
  %v420 = vunpack.c.h.b16 %v375
  %v421 = vunpack.c.l.b16 %v376
  %v422 = vunpack.c.h.b16 %v376
  %v423 = vunpack.c.l.b16 %v377
  %v424 = vunpack.c.h.b16 %v377
  %v425 = vunpack.c.l.b16 %v378
  %v426 = vunpack.c.h.b16 %v378
  %v427 = vunpack.c.l.b16 %v379
  %v428 = vunpack.c.h.b16 %v379
  %v429 = vunpack.c.l.b16 %v380
  %v430 = vunpack.c.h.b16 %v380
  %v431 = vunpack.c.l.b16 %v381
  %v432 = vunpack.c.h.b16 %v381
  %v433 = vunpack.c.l.b16 %v382
  %v434 = vunpack.c.h.b16 %v382
  %v435 = vunpack.c.l.b16 %v383
  %v436 = vunpack.c.h.b16 %v383
  %v437 = vunpack.c.l.b16 %v384
  %v438 = vunpack.c.h.b16 %v384
  %v439 = vpack.c.b16 %v409, %v407
  %v440 = vpack.c.b16 %v410, %v408
  %v441 = vpack.c.b16 %v413, %v411
  %v442 = vpack.c.b16 %v414, %v412
  %v443 = vpack.c.b16 %v417, %v415
  %v444 = vpack.c.b16 %v418, %v416
  %v445 = vpack.c.b16 %v421, %v419
  %v446 = vpack.c.b16 %v422, %v420
  %v447 = vpack.c.b16 %v425, %v423
  %v448 = vpack.c.b16 %v426, %v424
  %v449 = vpack.c.b16 %v429, %v427
  %v450 = vpack.c.b16 %v430, %v428
  %v451 = vpack.c.b16 %v433, %v431
  %v452 = vpack.c.b16 %v434, %v432
  %v453 = vpack.c.b16 %v437, %v435
  %v454 = vpack.c.b16 %v438, %v436
  %471 = vmatpush.bf16.msra.mxu0 %v453
  %472 = vmatpush.bf16.msra.mxu0 %v451
  %473 = vmatpush.bf16.msra.mxu0 %v449
  %474 = vmatpush.bf16.msra.mxu0 %v447
  %475 = vmatpush.bf16.msra.mxu0 %v445
  %476 = vmatpush.bf16.msra.mxu0 %v443
  %477 = vmatpush.bf16.msra.mxu0 %v441
  %478 = vmatpush.bf16.msra.mxu0 %v439
  %479 = vmatmul.bf16.gmra.mxu0 %v368
  %v480 = vpop.f32.mrf.mxu0
  %v481 = vadd.f32 %v387, %v480
  %v482 = vpop.f32.mrf.mxu0
  %v483 = vadd.f32 %v387, %v482
  %484 = vdwg.mxu0
  %485 = vmatpush.bf16.msra.mxu0 %v454
  %486 = vmatpush.bf16.msra.mxu0 %v452
  %487 = vmatpush.bf16.msra.mxu0 %v450
  %488 = vmatpush.bf16.msra.mxu0 %v448
  %489 = vmatpush.bf16.msra.mxu0 %v446
  %490 = vmatpush.bf16.msra.mxu0 %v444
  %491 = vmatpush.bf16.msra.mxu0 %v442
  %492 = vmatpush.bf16.msra.mxu0 %v440
  %493 = vmatmul.bf16.gmra.mxu0 %v368
  %v494 = vpop.f32.mrf.mxu0
  %v495 = vadd.f32 %v388, %v494
  %v496 = vpop.f32.mrf.mxu0
  %v497 = vadd.f32 %v388, %v496
  %498 = vdwg.mxu0
  %v499 = vmax.f32 %v481, 0.0
  %v500 = vmax.f32 %v495, 0.0
  %v501 = vmax.f32 %v483, 0.0
  %v502 = vmax.f32 %v497, 0.0
  %v503 = vpack.c.bf16 %v501, %v499
  %v504 = vpack.c.bf16 %v502, %v500
  %v505 = vld [vmem:[%s5] sm:$0xff]
  %v506 = vld [vmem:[%s5 + $0x8] sm:$0xff]
  %v507 = vld [vmem:[%s5 + $0x10] sm:$0xff]
  %v508 = vld [vmem:[%s5 + $0x18] sm:$0xff]
  %v509 = vld [vmem:[%s5 + $0x20] sm:$0xff]
  %v510 = vld [vmem:[%s5 + $0x28] sm:$0xff]
  %v511 = vld [vmem:[%s5 + $0x30] sm:$0xff]
  %v512 = vld [vmem:[%s5 + $0x38] sm:$0xff]
  %v513 = vld [vmem:[%s5 + $0x40] sm:$0xff]
  %v514 = vld [vmem:[%s5 + $0x48] sm:$0xff]
  %v515 = vld [vmem:[%s5 + $0x50] sm:$0xff]
  %v516 = vld [vmem:[%s5 + $0x58] sm:$0xff]
  %v517 = vld [vmem:[%s5 + $0x60] sm:$0xff]
  %v518 = vld [vmem:[%s5 + $0x68] sm:$0xff]
  %v519 = vld [vmem:[%s5 + $0x70] sm:$0xff]
  %v520 = vld [vmem:[%s5 + $0x78] sm:$0xff]
  %v521 = vld [vmem:[%s5 + $0x80] sm:$0xff]
  %v522 = vld [vmem:[%s5 + $0x88] sm:$0xff]
  %v523 = vld [vmem:[%s5 + $0x90] sm:$0xff]
  %v524 = vld [vmem:[%s5 + $0x98] sm:$0xff]
  %v525 = vld [vmem:[%s5 + $0xa0] sm:$0xff]
  %v526 = vld [vmem:[%s5 + $0xa8] sm:$0xff]
  %v527 = vld [vmem:[%s5 + $0xb0] sm:$0xff]
  %v528 = vld [vmem:[%s5 + $0xb8] sm:$0xff]
  %v529 = vld [vmem:[%s5 + $0xc0] sm:$0xff]
  %v530 = vld [vmem:[%s5 + $0xc8] sm:$0xff]
  %v531 = vld [vmem:[%s5 + $0xd0] sm:$0xff]
  %v532 = vld [vmem:[%s5 + $0xd8] sm:$0xff]
  %v533 = vld [vmem:[%s5 + $0xe0] sm:$0xff]
  %v534 = vld [vmem:[%s5 + $0xe8] sm:$0xff]
  %v535 = vld [vmem:[%s5 + $0xf0] sm:$0xff]
  %v536 = vld [vmem:[%s5 + $0xf8] sm:$0xff]
  %v537 = vld [vmem:[%s6] sm:$0x3]
  %v539 = vperm.slane %v537, 0
  %v540 = vperm.slane %v537, 1
  %v575 = vunpack.c.l.b16 %v505
  %v576 = vunpack.c.h.b16 %v505
  %v577 = vunpack.c.l.b16 %v506
  %v578 = vunpack.c.h.b16 %v506
  %v579 = vunpack.c.l.b16 %v507
  %v580 = vunpack.c.h.b16 %v507
  %v581 = vunpack.c.l.b16 %v508
  %v582 = vunpack.c.h.b16 %v508
  %v583 = vunpack.c.l.b16 %v509
  %v584 = vunpack.c.h.b16 %v509
  %v585 = vunpack.c.l.b16 %v510
  %v586 = vunpack.c.h.b16 %v510
  %v587 = vunpack.c.l.b16 %v511
  %v588 = vunpack.c.h.b16 %v511
  %v589 = vunpack.c.l.b16 %v512
  %v590 = vunpack.c.h.b16 %v512
  %v591 = vunpack.c.l.b16 %v513
  %v592 = vunpack.c.h.b16 %v513
  %v593 = vunpack.c.l.b16 %v514
  %v594 = vunpack.c.h.b16 %v514
  %v595 = vunpack.c.l.b16 %v515
  %v596 = vunpack.c.h.b16 %v515
  %v597 = vunpack.c.l.b16 %v516
  %v598 = vunpack.c.h.b16 %v516
  %v599 = vunpack.c.l.b16 %v517
  %v600 = vunpack.c.h.b16 %v517
  %v601 = vunpack.c.l.b16 %v518
  %v602 = vunpack.c.h.b16 %v518
  %v603 = vunpack.c.l.b16 %v519
  %v604 = vunpack.c.h.b16 %v519
  %v605 = vunpack.c.l.b16 %v520
  %v606 = vunpack.c.h.b16 %v520
  %v607 = vunpack.c.l.b16 %v521
  %v608 = vunpack.c.h.b16 %v521
  %v609 = vunpack.c.l.b16 %v522
  %v610 = vunpack.c.h.b16 %v522
  %v611 = vunpack.c.l.b16 %v523
  %v612 = vunpack.c.h.b16 %v523
  %v613 = vunpack.c.l.b16 %v524
  %v614 = vunpack.c.h.b16 %v524
  %v615 = vunpack.c.l.b16 %v525
  %v616 = vunpack.c.h.b16 %v525
  %v617 = vunpack.c.l.b16 %v526
  %v618 = vunpack.c.h.b16 %v526
  %v619 = vunpack.c.l.b16 %v527
  %v620 = vunpack.c.h.b16 %v527
  %v621 = vunpack.c.l.b16 %v528
  %v622 = vunpack.c.h.b16 %v528
  %v623 = vunpack.c.l.b16 %v529
  %v624 = vunpack.c.h.b16 %v529
  %v625 = vunpack.c.l.b16 %v530
  %v626 = vunpack.c.h.b16 %v530
  %v627 = vunpack.c.l.b16 %v531
  %v628 = vunpack.c.h.b16 %v531
  %v629 = vunpack.c.l.b16 %v532
  %v630 = vunpack.c.h.b16 %v532
  %v631 = vunpack.c.l.b16 %v533
  %v632 = vunpack.c.h.b16 %v533
  %v633 = vunpack.c.l.b16 %v534
  %v634 = vunpack.c.h.b16 %v534
  %v635 = vunpack.c.l.b16 %v535
  %v636 = vunpack.c.h.b16 %v535
  %v637 = vunpack.c.l.b16 %v536
  %v638 = vunpack.c.h.b16 %v536
  %v639 = vpack.c.b16 %v577, %v575
  %v640 = vpack.c.b16 %v578, %v576
  %v641 = vpack.c.b16 %v581, %v579
  %v642 = vpack.c.b16 %v582, %v580
  %v643 = vpack.c.b16 %v585, %v583
  %v644 = vpack.c.b16 %v586, %v584
  %v645 = vpack.c.b16 %v589, %v587
  %v646 = vpack.c.b16 %v590, %v588
  %v647 = vpack.c.b16 %v593, %v591
  %v648 = vpack.c.b16 %v594, %v592
  %v649 = vpack.c.b16 %v597, %v595
  %v650 = vpack.c.b16 %v598, %v596
  %v651 = vpack.c.b16 %v601, %v599
  %v652 = vpack.c.b16 %v602, %v600
  %v653 = vpack.c.b16 %v605, %v603
  %v654 = vpack.c.b16 %v606, %v604
  %v655 = vpack.c.b16 %v609, %v607
  %v656 = vpack.c.b16 %v610, %v608
  %v657 = vpack.c.b16 %v613, %v611
  %v658 = vpack.c.b16 %v614, %v612
  %v659 = vpack.c.b16 %v617, %v615
  %v660 = vpack.c.b16 %v618, %v616
  %v661 = vpack.c.b16 %v621, %v619
  %v662 = vpack.c.b16 %v622, %v620
  %v663 = vpack.c.b16 %v625, %v623
  %v664 = vpack.c.b16 %v626, %v624
  %v665 = vpack.c.b16 %v629, %v627
  %v666 = vpack.c.b16 %v630, %v628
  %v667 = vpack.c.b16 %v633, %v631
  %v668 = vpack.c.b16 %v634, %v632
  %v669 = vpack.c.b16 %v637, %v635
  %v670 = vpack.c.b16 %v638, %v636
  %703 = vmatpush.bf16.msra.mxu0 %v653
  %704 = vmatpush.bf16.msra.mxu0 %v651
  %705 = vmatpush.bf16.msra.mxu0 %v649
  %706 = vmatpush.bf16.msra.mxu0 %v647
  %707 = vmatpush.bf16.msra.mxu0 %v645
  %708 = vmatpush.bf16.msra.mxu0 %v643
  %709 = vmatpush.bf16.msra.mxu0 %v641
  %710 = vmatpush.bf16.msra.mxu0 %v639
  %711 = vmatmul.bf16.gmra.mxu0 %v503
  %v712 = vpop.f32.mrf.mxu0
  %v713 = vadd.f32 %v539, %v712
  %v714 = vpop.f32.mrf.mxu0
  %v715 = vadd.f32 %v539, %v714
  %716 = vdwg.mxu0
  %717 = vmatpush.bf16.msra.mxu0 %v669
  %718 = vmatpush.bf16.msra.mxu0 %v667
  %719 = vmatpush.bf16.msra.mxu0 %v665
  %720 = vmatpush.bf16.msra.mxu0 %v663
  %721 = vmatpush.bf16.msra.mxu0 %v661
  %722 = vmatpush.bf16.msra.mxu0 %v659
  %723 = vmatpush.bf16.msra.mxu0 %v657
  %724 = vmatpush.bf16.msra.mxu0 %v655
  %725 = vmatmul.bf16.gmra.mxu0 %v504
  %v726 = vpop.f32.mrf.mxu0
  %v727 = vadd.f32 %v713, %v726
  %v728 = vpop.f32.mrf.mxu0
  %v729 = vadd.f32 %v715, %v728
  %730 = vdwg.mxu0
  %731 = vmatpush.bf16.msra.mxu0 %v654
  %732 = vmatpush.bf16.msra.mxu0 %v652
  %733 = vmatpush.bf16.msra.mxu0 %v650
  %734 = vmatpush.bf16.msra.mxu0 %v648
  %735 = vmatpush.bf16.msra.mxu0 %v646
  %736 = vmatpush.bf16.msra.mxu0 %v644
  %737 = vmatpush.bf16.msra.mxu0 %v642
  %738 = vmatpush.bf16.msra.mxu0 %v640
  %739 = vmatmul.bf16.gmra.mxu0 %v503
  %v740 = vpop.f32.mrf.mxu0
  %v741 = vadd.f32 %v540, %v740
  %v742 = vpop.f32.mrf.mxu0
  %v743 = vadd.f32 %v540, %v742
  %744 = vdwg.mxu0
  %745 = vmatpush.bf16.msra.mxu0 %v670
  %746 = vmatpush.bf16.msra.mxu0 %v668
  %747 = vmatpush.bf16.msra.mxu0 %v666
  %748 = vmatpush.bf16.msra.mxu0 %v664
  %749 = vmatpush.bf16.msra.mxu0 %v662
  %750 = vmatpush.bf16.msra.mxu0 %v660
  %751 = vmatpush.bf16.msra.mxu0 %v658
  %752 = vmatpush.bf16.msra.mxu0 %v656
  %753 = vmatmul.bf16.gmra.mxu0 %v504
  %v754 = vpop.f32.mrf.mxu0
  %v755 = vadd.f32 %v741, %v754
  %v756 = vpop.f32.mrf.mxu0
  %v757 = vadd.f32 %v743, %v756
  %758 = vdwg.mxu0
  %v759 = vmax.f32 %v727, 0.0
  %v760 = vmax.f32 %v755, 0.0
  %v761 = vmax.f32 %v729, 0.0
  %v762 = vmax.f32 %v757, 0.0
  %v763 = vpack.c.bf16 %v761, %v759
  %v764 = vpack.c.bf16 %v762, %v760
  %v765 = vld [vmem:[%s7] sm:$0xf]
  %v766 = vld [vmem:[%s7 + $0x4] sm:$0xf]
  %v767 = vld [vmem:[%s7 + $0x8] sm:$0xf]
  %v768 = vld [vmem:[%s7 + $0xc] sm:$0xf]
  %v769 = vld [vmem:[%s7 + $0x10] sm:$0xf]
  %v770 = vld [vmem:[%s7 + $0x14] sm:$0xf]
  %v771 = vld [vmem:[%s7 + $0x18] sm:$0xf]
  %v772 = vld [vmem:[%s7 + $0x1c] sm:$0xf]
  %v773 = vld [vmem:[%s7 + $0x20] sm:$0xf]
  %v774 = vld [vmem:[%s7 + $0x24] sm:$0xf]
  %v775 = vld [vmem:[%s7 + $0x28] sm:$0xf]
  %v776 = vld [vmem:[%s7 + $0x2c] sm:$0xf]
  %v777 = vld [vmem:[%s7 + $0x30] sm:$0xf]
  %v778 = vld [vmem:[%s7 + $0x34] sm:$0xf]
  %v779 = vld [vmem:[%s7 + $0x38] sm:$0xf]
  %v780 = vld [vmem:[%s7 + $0x3c] sm:$0xf]
  %v781 = vld [vmem:[%s7 + $0x40] sm:$0xf]
  %v782 = vld [vmem:[%s7 + $0x44] sm:$0xf]
  %v783 = vld [vmem:[%s7 + $0x48] sm:$0xf]
  %v784 = vld [vmem:[%s7 + $0x4c] sm:$0xf]
  %v785 = vld [vmem:[%s7 + $0x50] sm:$0xf]
  %v786 = vld [vmem:[%s7 + $0x54] sm:$0xf]
  %v787 = vld [vmem:[%s7 + $0x58] sm:$0xf]
  %v788 = vld [vmem:[%s7 + $0x5c] sm:$0xf]
  %v789 = vld [vmem:[%s7 + $0x60] sm:$0xf]
  %v790 = vld [vmem:[%s7 + $0x64] sm:$0xf]
  %v791 = vld [vmem:[%s7 + $0x68] sm:$0xf]
  %v792 = vld [vmem:[%s7 + $0x6c] sm:$0xf]
  %v793 = vld [vmem:[%s7 + $0x70] sm:$0xf]
  %v794 = vld [vmem:[%s7 + $0x74] sm:$0xf]
  %v795 = vld [vmem:[%s7 + $0x78] sm:$0xf]
  %v796 = vld [vmem:[%s7 + $0x7c] sm:$0xf]
  %v797 = vld [vmem:[%s8] sm:$0x1]
  %v799 = vperm.slane %v797, 0
  %v833 = vunpack.c.l.b16 %v765
  %v834 = vunpack.c.l.b16 %v766
  %v835 = vunpack.c.l.b16 %v767
  %v836 = vunpack.c.l.b16 %v768
  %v837 = vunpack.c.l.b16 %v769
  %v838 = vunpack.c.l.b16 %v770
  %v839 = vunpack.c.l.b16 %v771
  %v840 = vunpack.c.l.b16 %v772
  %v841 = vunpack.c.l.b16 %v773
  %v842 = vunpack.c.l.b16 %v774
  %v843 = vunpack.c.l.b16 %v775
  %v844 = vunpack.c.l.b16 %v776
  %v845 = vunpack.c.l.b16 %v777
  %v846 = vunpack.c.l.b16 %v778
  %v847 = vunpack.c.l.b16 %v779
  %v848 = vunpack.c.l.b16 %v780
  %v849 = vunpack.c.l.b16 %v781
  %v850 = vunpack.c.l.b16 %v782
  %v851 = vunpack.c.l.b16 %v783
  %v852 = vunpack.c.l.b16 %v784
  %v853 = vunpack.c.l.b16 %v785
  %v854 = vunpack.c.l.b16 %v786
  %v855 = vunpack.c.l.b16 %v787
  %v856 = vunpack.c.l.b16 %v788
  %v857 = vunpack.c.l.b16 %v789
  %v858 = vunpack.c.l.b16 %v790
  %v859 = vunpack.c.l.b16 %v791
  %v860 = vunpack.c.l.b16 %v792
  %v861 = vunpack.c.l.b16 %v793
  %v862 = vunpack.c.l.b16 %v794
  %v863 = vunpack.c.l.b16 %v795
  %v864 = vunpack.c.l.b16 %v796
  %v865 = vpack.c.b16 %v834, %v833
  %v866 = vpack.c.b16 %v836, %v835
  %v867 = vpack.c.b16 %v838, %v837
  %v868 = vpack.c.b16 %v840, %v839
  %v869 = vpack.c.b16 %v842, %v841
  %v870 = vpack.c.b16 %v844, %v843
  %v871 = vpack.c.b16 %v846, %v845
  %v872 = vpack.c.b16 %v848, %v847
  %v873 = vpack.c.b16 %v850, %v849
  %v874 = vpack.c.b16 %v852, %v851
  %v875 = vpack.c.b16 %v854, %v853
  %v876 = vpack.c.b16 %v856, %v855
  %v877 = vpack.c.b16 %v858, %v857
  %v878 = vpack.c.b16 %v860, %v859
  %v879 = vpack.c.b16 %v862, %v861
  %v880 = vpack.c.b16 %v864, %v863
  %897 = vmatpush.bf16.msra.mxu0 %v872
  %898 = vmatpush.bf16.msra.mxu0 %v871
  %899 = vmatpush.bf16.msra.mxu0 %v870
  %900 = vmatpush.bf16.msra.mxu0 %v869
  %901 = vmatpush.bf16.msra.mxu0 %v868
  %902 = vmatpush.bf16.msra.mxu0 %v867
  %903 = vmatpush.bf16.msra.mxu0 %v866
  %904 = vmatpush.bf16.msra.mxu0 %v865
  %905 = vmatmul.bf16.gmra.mxu0 %v763
  %v906 = vpop.f32.mrf.mxu0
  %v907 = vadd.f32 %v799, %v906
  %v908 = vpop.f32.mrf.mxu0
  %v909 = vadd.f32 %v799, %v908
  %910 = vdwg.mxu0
  %911 = vmatpush.bf16.msra.mxu0 %v880
  %912 = vmatpush.bf16.msra.mxu0 %v879
  %913 = vmatpush.bf16.msra.mxu0 %v878
  %914 = vmatpush.bf16.msra.mxu0 %v877
  %915 = vmatpush.bf16.msra.mxu0 %v876
  %916 = vmatpush.bf16.msra.mxu0 %v875
  %917 = vmatpush.bf16.msra.mxu0 %v874
  %918 = vmatpush.bf16.msra.mxu0 %v873
  %919 = vmatmul.bf16.gmra.mxu0 %v764
  %v920 = vpop.f32.mrf.mxu0
  %v921 = vadd.f32 %v907, %v920
  %v922 = vpop.f32.mrf.mxu0
  %v923 = vadd.f32 %v909, %v922
  %924 = vdwg.mxu0
  %v925 = vmax.f32 %v921, 0.0
  %v926 = vmax.f32 %v923, 0.0
  %v927 = vpack.c.bf16 %v926, %v925
  %v928 = vld [vmem:[%s9] sm:$0xf]
  %v929 = vld [vmem:[%s9 + $0x4] sm:$0xf]
  %v930 = vld [vmem:[%s9 + $0x8] sm:$0xf]
  %v931 = vld [vmem:[%s9 + $0xc] sm:$0xf]
  %v932 = vld [vmem:[%s9 + $0x10] sm:$0xf]
  %v933 = vld [vmem:[%s9 + $0x14] sm:$0xf]
  %v934 = vld [vmem:[%s9 + $0x18] sm:$0xf]
  %v935 = vld [vmem:[%s9 + $0x1c] sm:$0xf]
  %v936 = vld [vmem:[%s9 + $0x20] sm:$0xf]
  %v937 = vld [vmem:[%s9 + $0x24] sm:$0xf]
  %v938 = vld [vmem:[%s9 + $0x28] sm:$0xf]
  %v939 = vld [vmem:[%s9 + $0x2c] sm:$0xf]
  %v940 = vld [vmem:[%s9 + $0x30] sm:$0xf]
  %v941 = vld [vmem:[%s9 + $0x34] sm:$0xf]
  %v942 = vld [vmem:[%s9 + $0x38] sm:$0xf]
  %v943 = vld [vmem:[%s9 + $0x3c] sm:$0xf]
  %v944 = vld [vmem:[%s10] sm:$0x1]
  %v946 = vperm.slane %v944, 0
  %v964 = vunpack.c.l.b16 %v928
  %v965 = vunpack.c.l.b16 %v929
  %v966 = vunpack.c.l.b16 %v930
  %v967 = vunpack.c.l.b16 %v931
  %v968 = vunpack.c.l.b16 %v932
  %v969 = vunpack.c.l.b16 %v933
  %v970 = vunpack.c.l.b16 %v934
  %v971 = vunpack.c.l.b16 %v935
  %v972 = vunpack.c.l.b16 %v936
  %v973 = vunpack.c.l.b16 %v937
  %v974 = vunpack.c.l.b16 %v938
  %v975 = vunpack.c.l.b16 %v939
  %v976 = vunpack.c.l.b16 %v940
  %v977 = vunpack.c.l.b16 %v941
  %v978 = vunpack.c.l.b16 %v942
  %v979 = vunpack.c.l.b16 %v943
  %v980 = vpack.c.b16 %v965, %v964
  %v981 = vpack.c.b16 %v967, %v966
  %v982 = vpack.c.b16 %v969, %v968
  %v983 = vpack.c.b16 %v971, %v970
  %v984 = vpack.c.b16 %v973, %v972
  %v985 = vpack.c.b16 %v975, %v974
  %v986 = vpack.c.b16 %v977, %v976
  %v987 = vpack.c.b16 %v979, %v978
  %996 = vmatpush.bf16.msra.mxu0 %v987
  %997 = vmatpush.bf16.msra.mxu0 %v986
  %998 = vmatpush.bf16.msra.mxu0 %v985
  %999 = vmatpush.bf16.msra.mxu0 %v984
  %1000 = vmatpush.bf16.msra.mxu0 %v983
  %1001 = vmatpush.bf16.msra.mxu0 %v982
  %1002 = vmatpush.bf16.msra.mxu0 %v981
  %1003 = vmatpush.bf16.msra.mxu0 %v980
  %1004 = vmatmul.bf16.gmra.mxu0 %v927
  %v1005 = vpop.f32.mrf.mxu0
  %v1006 = vadd.f32 %v946, %v1005
  %v1007 = vpop.f32.mrf.mxu0
  %v1008 = vadd.f32 %v946, %v1007
  %1009 = vdwg.mxu0
  %vm1010 = vcmask 261120
  %1011 = vst.msk [vmem:[%s11] sm:$0xff] %vm1010, %v1006
  %1012 = vst.msk [vmem:[%s11 + $0x8] sm:$0xff] %vm1010, %v1008
  // Predicated region
  $region46: #{ff_neural_network2.1} parent=0 // pred_check
    _
  $region47: #{ff_neural_network2.1} parent=0 // pred_check_branch
    %1014 = sbr.rel (0) target = $region49
  $region48: #{ff_neural_network2.1} parent=0 // pred_region
    _
  $region49: #{ff_neural_network2.1} parent=0 // pred_fallthru
    _
  // Predicated region
  $region50: #{ff_neural_network2.1} parent=0 // pred_check
    _
  $region51: #{ff_neural_network2.1} parent=0 // pred_check_branch
    %1016 = sbr.rel (0) target = $region53
  $region52: #{ff_neural_network2.1} parent=0 // pred_region
    _
  $region53: #{ff_neural_network2.1} parent=0 // pred_fallthru
    _

</llo_original>
